<compile_context>
chip_gen: v7x
topology: tpu7x:2x2x1
jax: 0.10.0
libtpu: 0.0.40
codegen_flags: <defaults>
</compile_context>

<pallas_src>
import functools

import jax
import jax.numpy as jnp
from jax.experimental import pallas as pl
from jax.experimental.pallas import tpu as pltpu


def _round_up(x, m):
    return ((x + m - 1) // m) * m


def _mlp_kernel(seed_ref, x_ref, w1_ref, b1_ref, w2_ref, b2_ref, out_ref, *,
                drop_prob, training, tile_m, hidden):
    # Layer 1: single fused contraction over the concatenated (state|action) features.
    h = (jnp.dot(x_ref[...], w1_ref[...], preferred_element_type=jnp.float32)
         + b1_ref[...])
    # ReLU
    h = jnp.maximum(h, 0.0)

    # Inverted dropout (train mode).  Counter-based hash PRNG in pure jnp integer ops:
    # lowers on Mosaic TPU and in interpret mode alike.
    if training and drop_prob > 0.0:
        seed_u = seed_ref[0].astype(jnp.uint32)
        row0 = (pl.program_id(0) * tile_m).astype(jnp.uint32)
        r = row0 + jax.lax.broadcasted_iota(jnp.uint32, h.shape, 0)
        c = jax.lax.broadcasted_iota(jnp.uint32, h.shape, 1)
        z = r * jnp.uint32(hidden) + c                      # unique global element id
        z = z ^ (seed_u * jnp.uint32(0x9E3779B9))           # mix in the seed
        # murmur3 fmix32 avalanche
        z = z ^ (z >> 16)
        z = z * jnp.uint32(0x85EBCA6B)
        z = z ^ (z >> 13)
        z = z * jnp.uint32(0xC2B2AE35)
        z = z ^ (z >> 16)
        # Integer-threshold keep decision: P(keep) = 1 - drop_prob (24-bit precision).
        bits24 = (z >> 8).astype(jnp.int32)                 # uniform in [0, 2^24)
        threshold = jnp.int32(min(int(round(drop_prob * (1 << 24))), 1 << 24))
        keep = bits24 >= threshold
        h = jnp.where(keep, h * (1.0 / (1.0 - drop_prob)), 0.0)

    # Layer 2
    out = jnp.dot(h, w2_ref[...], preferred_element_type=jnp.float32) + b2_ref[...]
    out_ref[...] = out.astype(out_ref.dtype)


def _forward_rows(params, x, seed, drop_prob, training):
    """Fused Linear-ReLU-Dropout-Linear over a [R, Ds+Da] row batch in one pallas_call."""
    R, d_in = x.shape
    H = params["w1"].shape[1]
    Ds = params["w2"].shape[1]

    # Row tile: 256 fills the MXU once many MC samples are batched; shrink (multiple
    # of 8) for tiny calls so padding stays negligible.
    tile_m = 256 if R >= 256 else _round_up(R, 8)
    R_pad = _round_up(R, tile_m)
    if R_pad != R:
        x = jnp.pad(x, ((0, R_pad - R), (0, 0)))

    kernel = functools.partial(
        _mlp_kernel,
        drop_prob=float(drop_prob), training=bool(training),
        tile_m=tile_m, hidden=H)

    grid_spec = pltpu.PrefetchScalarGridSpec(
        num_scalar_prefetch=1,                                  # dropout seed -> SMEM
        grid=(R_pad // tile_m,),
        in_specs=[
            pl.BlockSpec((tile_m, d_in), lambda i, _s: (i, 0)),  # activations: tiled rows
            pl.BlockSpec((d_in, H), lambda i, _s: (0, 0)),       # W1: VMEM-resident
            pl.BlockSpec((1, H), lambda i, _s: (0, 0)),          # b1
            pl.BlockSpec((H, Ds), lambda i, _s: (0, 0)),         # W2
            pl.BlockSpec((1, Ds), lambda i, _s: (0, 0)),         # b2
        ],
        out_specs=pl.BlockSpec((tile_m, Ds), lambda i, _s: (i, 0)),
    )
    # TODO(synk): output last dim is Ds=4 (masked partial stores); a lane-dense output
    # relayout is skipped here since the total output is a few KB even when batched.

    out = pl.pallas_call(
        kernel,
        out_shape=jax.ShapeDtypeStruct((R_pad, Ds), jnp.float32),
        grid_spec=grid_spec,
        compiler_params=pltpu.CompilerParams(
            dimension_semantics=("parallel",)),   # row tiles shard across v7x's 2 TCs
    )(jnp.asarray([seed], jnp.int32), x,
      params["w1"], params["b1"], params["w2"], params["b2"])
    return out[:R]


def mc_dropout_bnn_forward(params, state, action, seed=0, *,
                           drop_prob=0.5, training=True):
    """Equivalent of MCDropoutBNN.forward(state, action)."""
    x = jnp.concatenate([state.astype(jnp.float32), action.astype(jnp.float32)], axis=1)
    return _forward_rows(params, x, seed, drop_prob, training)


def mc_dropout_bnn_bayesian_pred(params, state, action, num_samples=50, seed=0, *,
                                 drop_prob=0.5):
    """Equivalent of MCDropoutBNN.bayesian_pred: all B*num_samples stochastic forwards
    are batched into a single fused pallas_call."""
    B, Ds = state.shape
    s_rep = jnp.repeat(state, num_samples, axis=0)
    a_rep = jnp.repeat(action, num_samples, axis=0)
    preds = mc_dropout_bnn_forward(params, s_rep, a_rep, seed=seed,
                                   drop_prob=drop_prob, training=True)
    preds = preds.reshape(B, num_samples, Ds)
    mean_pred = preds.mean(axis=1)
    var_pred = preds.var(axis=1, ddof=1)   # torch .var default is unbiased
    return mean_pred, var_pred


def init_params(key, state_dim, action_dim, hidden_size):
    """Init matching nn.Linear's default U(-1/sqrt(fan_in), +1/sqrt(fan_in)).
    W1 stored as [state_dim+action_dim, hidden], W2 as [hidden, state_dim] (x @ W + b)."""
    d_in = state_dim + action_dim
    k1, k2, k3, k4 = jax.random.split(key, 4)
    bound1 = 1.0 / float(d_in) ** 0.5
    bound2 = 1.0 / float(hidden_size) ** 0.5
    return {
        "w1": jax.random.uniform(k1, (d_in, hidden_size), jnp.float32, -bound1, bound1),
        "b1": jax.random.uniform(k2, (1, hidden_size), jnp.float32, -bound1, bound1),
        "w2": jax.random.uniform(k3, (hidden_size, state_dim), jnp.float32, -bound2, bound2),
        "b2": jax.random.uniform(k4, (1, state_dim), jnp.float32, -bound2, bound2),
    }


if __name__ == "__main__":
    state_dim, action_dim, hidden_size = 4, 4, 64
    batch = 8
    drop_prob = 0.5
    num_mc_samples = 50

    root = jax.random.PRNGKey(0)
    kp, ks, ka = jax.random.split(root, 3)
    params = init_params(kp, state_dim, action_dim, hidden_size)
    state = jax.random.normal(ks, (batch, state_dim), jnp.float32)
    action = jax.random.normal(ka, (batch, action_dim), jnp.float32)

    # Eval-mode forward (dropout = identity): verify against a pure-JAX reference.
    out_eval = mc_dropout_bnn_forward(params, state, action, seed=0,
                                      drop_prob=drop_prob, training=False)
    x_cat = jnp.concatenate([state, action], axis=1)
    ref = jnp.maximum(x_cat @ params["w1"] + params["b1"], 0.0) @ params["w2"] + params["b2"]
    assert jnp.allclose(out_eval, ref, rtol=1e-4, atol=1e-4)

    # Train-mode forward (dropout active; module default after __init__).
    out_train = mc_dropout_bnn_forward(params, state, action, seed=123,
                                       drop_prob=drop_prob, training=True)

    # MC-dropout Bayesian prediction: B*S = 400 stochastic rows in one pallas_call
    # (grid over 256-row tiles, weights stay resident in VMEM across the grid).
    mean_pred, var_pred = mc_dropout_bnn_bayesian_pred(
        params, state, action, num_samples=num_mc_samples, seed=7, drop_prob=drop_prob)

    jax.block_until_ready((out_eval, out_train, mean_pred, var_pred))
    assert out_eval.shape == (batch, state_dim)
    assert out_train.shape == (batch, state_dim)
    assert mean_pred.shape == (batch, state_dim)
    assert var_pred.shape == (batch, state_dim)
    assert bool(jnp.all(jnp.isfinite(out_train)))
    assert bool(jnp.all(jnp.isfinite(mean_pred)))
    assert bool(jnp.all(jnp.isfinite(var_pred)))
    assert bool(jnp.all(var_pred >= 0.0))
    print("KERNEL_OK")
</pallas_src>

<mosaic_0001>
module attributes {stable_mosaic.version = 11 : i64} {
  func.func @_mlp_kernel(%arg0: i32, %arg1: memref<1xi32, #tpu.memory_space<smem>>, %arg2: memref<8x8xf32, #tpu.memory_space<vmem>>, %arg3: memref<8x64xf32, #tpu.memory_space<vmem>>, %arg4: memref<1x64xf32, #tpu.memory_space<vmem>>, %arg5: memref<64x4xf32, #tpu.memory_space<vmem>>, %arg6: memref<1x4xf32, #tpu.memory_space<vmem>>, %arg7: memref<8x4xf32, #tpu.memory_space<vmem>>) attributes {dimension_semantics = [#tpu.dimension_semantics<parallel>], iteration_bounds = array<i64: 1>, scalar_prefetch = 1 : i64, scratch_operands = 0 : i64, tpu.core_type = #tpu.core_type<tc>, window_params = [{transform_indices = @transform_0, window_bounds = array<i64: 8, 8>}, {pipeline_mode = #tpu.pipeline_mode<synchronous>, transform_indices = @transform_1, window_bounds = array<i64: 8, 64>}, {pipeline_mode = #tpu.pipeline_mode<synchronous>, transform_indices = @transform_2, window_bounds = array<i64: 1, 64>}, {pipeline_mode = #tpu.pipeline_mode<synchronous>, transform_indices = @transform_3, window_bounds = array<i64: 64, 4>}, {pipeline_mode = #tpu.pipeline_mode<synchronous>, transform_indices = @transform_4, window_bounds = array<i64: 1, 4>}, {transform_indices = @transform_5, window_bounds = array<i64: 8, 4>}]} {
    %c0 = arith.constant 0 : index
    %c0_0 = arith.constant 0 : index
    %0 = vector.load %arg2[%c0, %c0_0] : memref<8x8xf32, #tpu.memory_space<vmem>>, vector<8x8xf32>
    %c0_1 = arith.constant 0 : index
    %c0_2 = arith.constant 0 : index
    %1 = vector.load %arg3[%c0_1, %c0_2] : memref<8x64xf32, #tpu.memory_space<vmem>>, vector<8x64xf32>
    %cst = arith.constant dense<0.000000e+00> : vector<8x64xf32>
    %2 = tpu.matmul %0, %1, %cst {dimension_numbers = #tpu.dot_dimension_numbers<[1], [0], [0], [1], [0, 0, 1, 1], [], []>} : vector<8x8xf32>, vector<8x64xf32>, vector<8x64xf32> -> vector<8x64xf32>
    %c0_3 = arith.constant 0 : index
    %c0_4 = arith.constant 0 : index
    %3 = vector.load %arg4[%c0_3, %c0_4] : memref<1x64xf32, #tpu.memory_space<vmem>>, vector<1x64xf32>
    %4 = vector.broadcast %3 : vector<1x64xf32> to vector<8x64xf32>
    %5 = arith.addf %2, %4 : vector<8x64xf32>
    %cst_5 = arith.constant 0.000000e+00 : f32
    %6 = vector.broadcast %cst_5 : f32 to vector<8x64xf32>
    %7 = arith.maximumf %5, %6 : vector<8x64xf32>
    %c0_6 = arith.constant 0 : index
    %c0_7 = arith.constant 0 : index
    %8 = vector.load %arg5[%c0_6, %c0_7] : memref<64x4xf32, #tpu.memory_space<vmem>>, vector<64x4xf32>
    %cst_8 = arith.constant dense<0.000000e+00> : vector<8x4xf32>
    %9 = tpu.matmul %7, %8, %cst_8 {dimension_numbers = #tpu.dot_dimension_numbers<[1], [0], [0], [1], [0, 0, 1, 1], [], []>} : vector<8x64xf32>, vector<64x4xf32>, vector<8x4xf32> -> vector<8x4xf32>
    %c0_9 = arith.constant 0 : index
    %c0_10 = arith.constant 0 : index
    %10 = vector.load %arg6[%c0_9, %c0_10] : memref<1x4xf32, #tpu.memory_space<vmem>>, vector<1x4xf32>
    %11 = vector.broadcast %10 : vector<1x4xf32> to vector<8x4xf32>
    %12 = arith.addf %9, %11 : vector<8x4xf32>
    %c0_11 = arith.constant 0 : index
    %c0_12 = arith.constant 0 : index
    %13 = vector.load %arg7[%c0_11, %c0_12] : memref<8x4xf32, #tpu.memory_space<vmem>>, vector<8x4xf32>
    tpu.vector_store %arg7[%c0_11, %c0_12], %12 {strides = array<i32>} : memref<8x4xf32, #tpu.memory_space<vmem>>, vector<8x4xf32>,
    return
  }
  func.func @transform_0(%arg0: i32, %arg1: memref<1xi32, #tpu.memory_space<smem>>) -> (i32, i32) {
    %c0_i32 = arith.constant 0 : i32
    %c0_i32_0 = arith.constant 0 : i32
    return %arg0, %c0_i32 : i32, i32
  }
  func.func @transform_1(%arg0: i32, %arg1: memref<1xi32, #tpu.memory_space<smem>>) -> (i32, i32) {
    %c0_i32 = arith.constant 0 : i32
    %c0_i32_0 = arith.constant 0 : i32
    %c0_i32_1 = arith.constant 0 : i32
    return %c0_i32, %c0_i32_0 : i32, i32
  }
  func.func @transform_2(%arg0: i32, %arg1: memref<1xi32, #tpu.memory_space<smem>>) -> (i32, i32) {
    %c0_i32 = arith.constant 0 : i32
    %c0_i32_0 = arith.constant 0 : i32
    %c0_i32_1 = arith.constant 0 : i32
    return %c0_i32, %c0_i32_0 : i32, i32
  }
  func.func @transform_3(%arg0: i32, %arg1: memref<1xi32, #tpu.memory_space<smem>>) -> (i32, i32) {
    %c0_i32 = arith.constant 0 : i32
    %c0_i32_0 = arith.constant 0 : i32
    %c0_i32_1 = arith.constant 0 : i32
    return %c0_i32, %c0_i32_0 : i32, i32
  }
  func.func @transform_4(%arg0: i32, %arg1: memref<1xi32, #tpu.memory_space<smem>>) -> (i32, i32) {
    %c0_i32 = arith.constant 0 : i32
    %c0_i32_0 = arith.constant 0 : i32
    %c0_i32_1 = arith.constant 0 : i32
    return %c0_i32, %c0_i32_0 : i32, i32
  }
  func.func @transform_5(%arg0: i32, %arg1: memref<1xi32, #tpu.memory_space<smem>>) -> (i32, i32) {
    %c0_i32 = arith.constant 0 : i32
    %c0_i32_0 = arith.constant 0 : i32
    return %arg0, %c0_i32 : i32, i32
  }
}

</mosaic_0001>

<llo_original>
// kernel: tpu_custom_call.1
$region0: #{tpu_custom_call.1}
  #allocation0 [shape = 'u32[]', space=smem, size = 0x4, offset = 0x4, fixed_abs, tag = 'smem constant byte address 0x4 - core index']
  #allocation1 [shape = 'u32[144,128]{1,0:T(1,128)}', space=vmem, size = 0x12000, scoped, tag = 'internal scratch']
  #allocation2 [shape = 's32[1]{0}', space=sflag, size = 0x4, scoped, tag = 'scoped memory for tpu_custom_call.1']
  #allocation3 [shape = 's32[1]{0:T(128)S(6)}', space=smem, size = 0x200, scoped, tag = 'prefetched SMEM operand 0']
  %s0 = inlined_call_operand.<no memory space> [shape: s32[1], index: 0, kind: input, shape index: {}]
  %s1 = inlined_call_operand.vmem [shape: f32[8,8], index: 1, kind: input, shape index: {}]
  %s2 = inlined_call_operand.vmem [shape: f32[8,64], index: 2, kind: input, shape index: {}]
  %s3 = inlined_call_operand.vmem [shape: f32[1,64], index: 3, kind: input, shape index: {}]
  %s4 = inlined_call_operand.vmem [shape: f32[64,4], index: 4, kind: input, shape index: {}]
  %s5 = inlined_call_operand.vmem [shape: f32[1,4], index: 5, kind: input, shape index: {}]
  %s6 = inlined_call_operand.vmem [shape: f32[8,4], index: 6, kind: output, shape index: {}]
  %s7 = sld [smem:[#allocation0]]
  $region30: #{tpu_custom_call.1} parent=0
    _
  %s9 = ssub.s32 1, %s7
  %s10 = scalar_select 0, %s9, %s7
  %11 = sst [smem:[#allocation3]] %s0
  // Predicated region
  $region2: #{tpu_custom_call.1} parent=0 // pred_check
    _
  $region3: #{tpu_custom_call.1} parent=0 // pred_check_branch
    %13 = sbr.rel (0) target = $region5
  $region4: #{tpu_custom_call.1} parent=0 // pred_region
    _
  $region5: #{tpu_custom_call.1} parent=0 // pred_fallthru
    _
  // Predicated region
  $region6: #{tpu_custom_call.1} parent=0 // pred_check
    _
  $region7: #{tpu_custom_call.1} parent=0 // pred_check_branch
    %15 = sbr.rel (0) target = $region9
  $region8: #{tpu_custom_call.1} parent=0 // pred_region
    _
  $region9: #{tpu_custom_call.1} parent=0 // pred_fallthru
    _
  // Predicated region
  $region10: #{tpu_custom_call.1} parent=0 // pred_check
    _
  $region11: #{tpu_custom_call.1} parent=0 // pred_check_branch
    %17 = sbr.rel (0) target = $region13
  $region12: #{tpu_custom_call.1} parent=0 // pred_region
    _
  $region13: #{tpu_custom_call.1} parent=0 // pred_fallthru
    _
  // Predicated region
  $region14: #{tpu_custom_call.1} parent=0 // pred_check
    _
  $region15: #{tpu_custom_call.1} parent=0 // pred_check_branch
    %19 = sbr.rel (0) target = $region17
  $region16: #{tpu_custom_call.1} parent=0 // pred_region
    _
  $region17: #{tpu_custom_call.1} parent=0 // pred_fallthru
    _
  // Predicated region
  $region18: #{tpu_custom_call.1} parent=0 // pred_check
    _
  $region19: #{tpu_custom_call.1} parent=0 // pred_check_branch
    %21 = sbr.rel (0) target = $region21
  $region20: #{tpu_custom_call.1} parent=0 // pred_region
    _
  $region21: #{tpu_custom_call.1} parent=0 // pred_fallthru
    _
  %v22 = vld [vmem:[%s1] sm:$0xff]
  %v23 = vld [vmem:[%s2] sm:$0xff]
  %v24 = vld [vmem:[%s3] sm:$0x1]
  %v26 = vlaneseq
  %v27 = vshrl.u32 %v26, 7
  %v28 = vsub.s32 0, %v27
  %v29 = vrot.slane %v24, %v28
  %vm31 = vcmask 64512
  %v33 = vsel %vm31, %v22, 0
  %35 = vmatprep.subr.mxu0 0.0
  %36 = vmatpush1.msra.mxu0 %v23
  %37 = vmatprep.subr.mxu0 0.0
  %38 = vmatpush1.msra.mxu0 0.0
  %39 = vmatprep.subr.mxu0 0.0
  %40 = vmatpush1.msra.mxu0 0.0
  %41 = vmatprep.subr.mxu0 0.0
  %42 = vmatpush1.msra.mxu0 0.0
  %43 = vmatprep.subr.mxu0 0.0
  %44 = vmatpush1.msra.mxu0 0.0
  %45 = vmatprep.subr.mxu0 0.0
  %46 = vmatpush1.msra.mxu0 0.0
  %47 = vmatprep.subr.mxu0 0.0
  %48 = vmatpush1.msra.mxu0 0.0
  %49 = vmatprep.subr.mxu0 0.0
  %50 = vmatpush1.msra.mxu0 0.0
  %51 = vmatprep.subr.mxu0 0.0
  %52 = vmatpush1.msra.mxu0 0.0
  %53 = vmatprep.subr.mxu0 0.0
  %54 = vmatpush1.msra.mxu0 0.0
  %55 = vmatprep.subr.mxu0 0.0
  %56 = vmatpush1.msra.mxu0 0.0
  %57 = vmatprep.subr.mxu0 0.0
  %58 = vmatpush1.msra.mxu0 0.0
  %59 = vmatprep.subr.mxu0 0.0
  %60 = vmatpush1.msra.mxu0 0.0
  %61 = vmatprep.subr.mxu0 0.0
  %62 = vmatpush1.msra.mxu0 0.0
  %63 = vmatprep.subr.mxu0 0.0
  %64 = vmatpush1.msra.mxu0 0.0
  %65 = vmatprep.subr.mxu0 0.0
  %66 = vmatpush1.msra.mxu0 0.0
  %67 = vmatprep.subr.mxu0 0.0
  %68 = vmatpush1.msra.mxu0 0.0
  %69 = vmatprep.subr.mxu0 0.0
  %70 = vmatpush1.msra.mxu0 0.0
  %71 = vmatprep.subr.mxu0 0.0
  %72 = vmatpush1.msra.mxu0 0.0
  %73 = vmatprep.subr.mxu0 0.0
  %74 = vmatpush1.msra.mxu0 0.0
  %75 = vmatprep.subr.mxu0 0.0
  %76 = vmatpush1.msra.mxu0 0.0
  %77 = vmatprep.subr.mxu0 0.0
  %78 = vmatpush1.msra.mxu0 0.0
  %79 = vmatprep.subr.mxu0 0.0
  %80 = vmatpush1.msra.mxu0 0.0
  %81 = vmatprep.subr.mxu0 0.0
  %82 = vmatpush1.msra.mxu0 0.0
  %83 = vmatprep.subr.mxu0 0.0
  %84 = vmatpush1.msra.mxu0 0.0
  %85 = vmatprep.subr.mxu0 0.0
  %86 = vmatpush1.msra.mxu0 0.0
  %87 = vmatprep.subr.mxu0 0.0
  %88 = vmatpush1.msra.mxu0 0.0
  %89 = vmatprep.subr.mxu0 0.0
  %90 = vmatpush1.msra.mxu0 0.0
  %91 = vmatprep.subr.mxu0 0.0
  %92 = vmatpush1.msra.mxu0 0.0
  %93 = vmatprep.subr.mxu0 0.0
  %94 = vmatpush1.msra.mxu0 0.0
  %95 = vmatprep.subr.mxu0 0.0
  %96 = vmatpush1.msra.mxu0 0.0
  %97 = vmatprep.subr.mxu0 0.0
  %98 = vmatpush1.msra.mxu0 0.0
  %99 = vmatprep.mubr.f32.mxu0 0.0
  %100 = vmatmul.mubr.f32.gmra.mrb[0].mxu0 %v33
  %v101 = vpop.f32.mrb[0].mxu0
  %v102 = vadd.f32 %v29, %v101
  %v103 = vpop.f32.mrb[0].mxu0
  %104 = vdwg.mxu0
  %v105 = vmax.f32 %v102, 0.0
  %v106 = vld [vmem:[%s4] sm:$0xff]
  %v107 = vld [vmem:[%s4 + $0x8] sm:$0xff]
  %v108 = vld [vmem:[%s4 + $0x10] sm:$0xff]
  %v109 = vld [vmem:[%s4 + $0x18] sm:$0xff]
  %v110 = vld [vmem:[%s4 + $0x20] sm:$0xff]
  %v111 = vld [vmem:[%s4 + $0x28] sm:$0xff]
  %v112 = vld [vmem:[%s4 + $0x30] sm:$0xff]
  %v113 = vld [vmem:[%s4 + $0x38] sm:$0xff]
  %v114 = vld [vmem:[%s5] sm:$0x1]
  %v116 = vlaneseq
  %v117 = vshrl.u32 %v116, 7
  %v118 = vsub.s32 0, %v117
  %v119 = vrot.slane %v114, %v118
  %vm121 = vcmask 523264
  %v123 = vsel %vm121, %v105, 0
  %125 = vmatprep.subr.mxu0 0.0
  %126 = vmatpush1.msra.mxu0 %v106
  %127 = vmatprep.subr.mxu0 0.0
  %128 = vmatpush1.msra.mxu0 %v107
  %129 = vmatprep.subr.mxu0 0.0
  %130 = vmatpush1.msra.mxu0 %v108
  %131 = vmatprep.subr.mxu0 0.0
  %132 = vmatpush1.msra.mxu0 %v109
  %133 = vmatprep.subr.mxu0 0.0
  %134 = vmatpush1.msra.mxu0 %v110
  %135 = vmatprep.subr.mxu0 0.0
  %136 = vmatpush1.msra.mxu0 %v111
  %137 = vmatprep.subr.mxu0 0.0
  %138 = vmatpush1.msra.mxu0 %v112
  %139 = vmatprep.subr.mxu0 0.0
  %140 = vmatpush1.msra.mxu0 %v113
  %141 = vmatprep.subr.mxu0 0.0
  %142 = vmatpush1.msra.mxu0 0.0
  %143 = vmatprep.subr.mxu0 0.0
  %144 = vmatpush1.msra.mxu0 0.0
  %145 = vmatprep.subr.mxu0 0.0
  %146 = vmatpush1.msra.mxu0 0.0
  %147 = vmatprep.subr.mxu0 0.0
  %148 = vmatpush1.msra.mxu0 0.0
  %149 = vmatprep.subr.mxu0 0.0
  %150 = vmatpush1.msra.mxu0 0.0
  %151 = vmatprep.subr.mxu0 0.0
  %152 = vmatpush1.msra.mxu0 0.0
  %153 = vmatprep.subr.mxu0 0.0
  %154 = vmatpush1.msra.mxu0 0.0
  %155 = vmatprep.subr.mxu0 0.0
  %156 = vmatpush1.msra.mxu0 0.0
  %157 = vmatprep.subr.mxu0 0.0
  %158 = vmatpush1.msra.mxu0 0.0
  %159 = vmatprep.subr.mxu0 0.0
  %160 = vmatpush1.msra.mxu0 0.0
  %161 = vmatprep.subr.mxu0 0.0
  %162 = vmatpush1.msra.mxu0 0.0
  %163 = vmatprep.subr.mxu0 0.0
  %164 = vmatpush1.msra.mxu0 0.0
  %165 = vmatprep.subr.mxu0 0.0
  %166 = vmatpush1.msra.mxu0 0.0
  %167 = vmatprep.subr.mxu0 0.0
  %168 = vmatpush1.msra.mxu0 0.0
  %169 = vmatprep.subr.mxu0 0.0
  %170 = vmatpush1.msra.mxu0 0.0
  %171 = vmatprep.subr.mxu0 0.0
  %172 = vmatpush1.msra.mxu0 0.0
  %173 = vmatprep.subr.mxu0 0.0
  %174 = vmatpush1.msra.mxu0 0.0
  %175 = vmatprep.subr.mxu0 0.0
  %176 = vmatpush1.msra.mxu0 0.0
  %177 = vmatprep.subr.mxu0 0.0
  %178 = vmatpush1.msra.mxu0 0.0
  %179 = vmatprep.subr.mxu0 0.0
  %180 = vmatpush1.msra.mxu0 0.0
  %181 = vmatprep.subr.mxu0 0.0
  %182 = vmatpush1.msra.mxu0 0.0
  %183 = vmatprep.subr.mxu0 0.0
  %184 = vmatpush1.msra.mxu0 0.0
  %185 = vmatprep.subr.mxu0 0.0
  %186 = vmatpush1.msra.mxu0 0.0
  %187 = vmatprep.subr.mxu0 0.0
  %188 = vmatpush1.msra.mxu0 0.0
  %189 = vmatprep.mubr.f32.mxu0 0.0
  %190 = vmatmul.mubr.f32.gmra.mrb[0].mxu0 %v123
  %v191 = vpop.f32.mrb[0].mxu0
  %v192 = vadd.f32 %v119, %v191
  %v193 = vpop.f32.mrb[0].mxu0
  %194 = vdwg.mxu0
  %vm195 = vcmask 31744
  %196 = vst.msk [vmem:[%s6] sm:$0xff] %vm195, %v192
  // Predicated region
  $region22: #{tpu_custom_call.1} parent=0 // pred_check
    _
  $region23: #{tpu_custom_call.1} parent=0 // pred_check_branch
    %198 = sbr.rel (0) target = $region25
  $region24: #{tpu_custom_call.1} parent=0 // pred_region
    _
  $region25: #{tpu_custom_call.1} parent=0 // pred_fallthru
    _
  // Predicated region
  $region26: #{tpu_custom_call.1} parent=0 // pred_check
    _
  $region27: #{tpu_custom_call.1} parent=0 // pred_check_branch
    %200 = sbr.rel (0) target = $region29
  $region28: #{tpu_custom_call.1} parent=0 // pred_region
    _
  $region29: #{tpu_custom_call.1} parent=0 // pred_fallthru
    _

</llo_original>
